<compile_context>
chip_gen: v7x
topology: tpu7x:2x2x1
jax: 0.10.0
libtpu: 0.0.40
codegen_flags: <defaults>
</compile_context>

<pallas_src>
import jax
import jax.numpy as jnp
from jax.experimental import pallas as pl
from jax.experimental.pallas import tpu as pltpu


def _make_asp_kernel(t_orig, t_tile, needs_mask):
    """Factory closing over static T info (original length, tile size, pad flag)."""

    def kernel(x_ref, w1t_ref, b1_ref, w2t_ref, out_ref,
               m_sc, se_sc, sxe_sc, sxxe_sc):
        t = pl.program_id(1)
        bb, tt, cc = x_ref.shape

        @pl.when(t == 0)
        def _():
            m_sc[...] = jnp.full_like(m_sc, -jnp.inf)
            se_sc[...] = jnp.zeros_like(se_sc)
            sxe_sc[...] = jnp.zeros_like(sxe_sc)
            sxxe_sc[...] = jnp.zeros_like(sxxe_sc)

        x = x_ref[...]                                   # (bb, tT, C), compute dtype
        x2 = x.reshape(bb * tt, cc)                      # merge leading dims -> 2-D MXU matmul

        # attention: Conv1d(C->A, k=1) -> tanh -> Conv1d(A->C, k=1); f32 accumulation.
        h = jnp.tanh(
            jnp.dot(x2, w1t_ref[...], preferred_element_type=jnp.float32) + b1_ref[...]
        )                                                # (bb*tT, A) f32
        logits = jnp.dot(h.astype(w2t_ref.dtype), w2t_ref[...],
                         preferred_element_type=jnp.float32)      # (bb*tT, C) f32
        # NOTE: conv2 bias b2 intentionally omitted — softmax over T is shift-invariant
        # per channel, so adding it before softmax is a no-op.
        logits = logits.reshape(bb, tt, cc)              # (bb, tT, C)

        # Online softmax over T, folded into per-(batch,channel) scalars; the normalized
        # attention weights `w` are never materialized.
        m_old = m_sc[...]                                # (bb, 1, C)
        m_tile = jnp.max(logits, axis=1, keepdims=True)  # (bb, 1, C)
        m_new = jnp.maximum(m_old, m_tile)
        alpha = jnp.exp(m_old - m_new)                   # 0 on first tile (m_old = -inf)
        e = jnp.exp(logits - m_new)                      # (bb, tT, C) f32

        if needs_mask:
            # Zero padded timesteps of the final T tile (pad rows are x=0, logits finite).
            rows = jax.lax.broadcasted_iota(jnp.int32, (tt, 1), 0) + t * t_tile
            e = e * (rows < t_orig).astype(jnp.float32)

        xf = x.astype(jnp.float32)                       # statistics accumulate in f32
        xe = xf * e
        se_sc[...] = alpha * se_sc[...] + jnp.sum(e, axis=1, keepdims=True)
        sxe_sc[...] = alpha * sxe_sc[...] + jnp.sum(xe, axis=1, keepdims=True)
        sxxe_sc[...] = alpha * sxxe_sc[...] + jnp.sum(xf * xe, axis=1, keepdims=True)
        m_sc[...] = m_new

        @pl.when(t == pl.num_programs(1) - 1)
        def _():
            inv = 1.0 / se_sc[...]                       # tiny (bb,1,C) exact divide
            mu = sxe_sc[...] * inv                       # sum(x * w)
            var = sxxe_sc[...] * inv - mu * mu           # sum(x^2 * w) - mu^2
            rh = jnp.sqrt(jnp.maximum(var, 1e-5))
            out_ref[...] = jnp.concatenate([mu, rh], axis=1).astype(out_ref.dtype)

    return kernel


def _tpu_generation_info():
    """(physical VMEM bytes, has-2-TensorCores) with a conservative fallback."""
    try:
        vmem = int(pltpu.get_tpu_info().vmem_capacity_bytes)
    except Exception:
        vmem = 64 * 1024 * 1024                          # assume the tightest chip (v7x)
    # Heuristic: 64 MiB/TC => v7x (2 TCs per chip); 128 MiB => v5e/v6e (1 TC).
    two_cores = vmem <= 64 * 1024 * 1024
    return vmem, two_cores


def _choose_tiling(B, C, T, A, itemsize, vmem_phys_bytes, two_cores):
    """Generation-aware (block_b, block_t) and vmem_limit_bytes."""
    mib = 1024 * 1024
    # ~75% of physical VMEM as the compiler limit: v7x 64 MiB -> 48 MiB, v5e/v6e 128 -> 96.
    vmem_limit = min(int(0.75 * vmem_phys_bytes), 112 * mib)
    # Keep the resident working set (x double-buffer + live temporaries) at ~half the
    # limit to leave compiler-scratch headroom.
    block_budget = vmem_limit // 2
    pack = 8 if itemsize >= 4 else 16                    # sublane pack of the compute dtype
    t_full = pack * ((T + pack - 1) // pack)

    def pick_t(bb):
        # constants: weights (double-buffered) + bias + scratch + output block
        const = 2 * 2 * C * A * itemsize + 2 * A * 4 + 4 * bb * C * 4 + 2 * bb * 2 * C * 4
        # per timestep: x (double-buffered) + ~5 live f32 (T,C) temps + h / tanh temp
        per_row = bb * (C * (2 * itemsize + 5 * 4) + 2 * A * 4)
        rows = (block_budget - const) // per_row
        rows = max(pack, (rows // pack) * pack)
        return min(t_full, rows)

    bb_cands = [d for d in range(1, B + 1) if B % d == 0]
    if two_cores and B >= 2:
        # v7x: keep >= 2 batch grid steps so the "parallel" axis can shard over both TCs.
        bb_cands = [d for d in bb_cands if B // d >= 2] or [1]

    best_bb, best_t = 1, pick_t(1)
    for bb in bb_cands:
        tT = pick_t(bb)
        if bb * tT > best_bb * best_t:
            best_bb, best_t = bb, tT
    return (best_bb, best_t), vmem_limit


def attentive_statistics_pooling(x, w1, b1, w2, b2=None, *,
                                 compute_dtype=jnp.bfloat16,
                                 block_b=None, block_t=None):
    """x: (B, C, T) float32 (PyTorch NCT layout). Returns (B, 2C) = cat([mu, rh], dim=1).

    compute_dtype controls the DMA/matmul-operand dtype of x and the weights (default
    bfloat16 — the kernel is HBM-read bound on x); accumulation is always float32.
    """
    B, C, T = x.shape
    A = w1.shape[0]
    itemsize = jnp.dtype(compute_dtype).itemsize

    vmem_phys, two_cores = _tpu_generation_info()
    (auto_bb, auto_t), vmem_limit = _choose_tiling(B, C, T, A, itemsize, vmem_phys, two_cores)
    bb = block_b if block_b is not None else auto_bb
    tT = block_t if block_t is not None else auto_t
    assert B % bb == 0, "block_b must divide B"
    assert tT % 8 == 0, "block_t must be a multiple of 8"

    nt = (T + tT - 1) // tT
    t_pad = nt * tT
    needs_mask = t_pad != T

    # Lane-friendly layout: time on sublanes, channels on lanes; pad T to the tile grid.
    xt = jnp.transpose(x, (0, 2, 1)).astype(compute_dtype)        # (B, T, C)
    if needs_mask:
        xt = jnp.pad(xt, ((0, 0), (0, t_pad - T), (0, 0)))        # (B, T_pad, C), zeros
    w1t = jnp.transpose(w1).astype(compute_dtype)                 # (C, A)
    w2t = jnp.transpose(w2).astype(compute_dtype)                 # (A, C)
    b1r = b1.reshape(1, A).astype(jnp.float32)
    # b2 accepted for API parity but unused: softmax(dim=T) is shift-invariant per channel.

    cost = pl.CostEstimate(
        flops=4 * B * t_pad * C * A,                              # two k=1 conv matmuls
        transcendentals=B * t_pad * (A + C),                      # tanh + exp
        bytes_accessed=B * t_pad * C * itemsize + 2 * C * A * itemsize + A * 4 + B * 2 * C * 4,
    )

    out = pl.pallas_call(
        _make_asp_kernel(T, tT, needs_mask),
        out_shape=jax.ShapeDtypeStruct((B, 2, C), jnp.float32),
        grid=(B // bb, nt),
        in_specs=[
            pl.BlockSpec((bb, tT, C), lambda i, t: (i, t, 0)),    # x tile (time-tiled)
            pl.BlockSpec((C, A), lambda i, t: (0, 0)),            # W1^T (constant)
            pl.BlockSpec((1, A), lambda i, t: (0, 0)),            # b1   (constant)
            pl.BlockSpec((A, C), lambda i, t: (0, 0)),            # W2^T (constant)
        ],
        out_specs=pl.BlockSpec((bb, 2, C), lambda i, t: (i, 0, 0)),  # mu row 0, rh row 1
        scratch_shapes=[
            pltpu.VMEM((bb, 1, C), jnp.float32),   # running max m
            pltpu.VMEM((bb, 1, C), jnp.float32),   # sum(e)
            pltpu.VMEM((bb, 1, C), jnp.float32),   # sum(x*e)
            pltpu.VMEM((bb, 1, C), jnp.float32),   # sum(x^2*e)
        ],
        compiler_params=pltpu.CompilerParams(
            dimension_semantics=("parallel", "arbitrary"),
            vmem_limit_bytes=vmem_limit,
        ),
        cost_estimate=cost,
    )(xt, w1t, b1r, w2t)

    # torch.cat([mu, rh], dim=1): row 0 is mu, row 1 is rh -> free reshape.
    return out.reshape(B, 2 * C)


def reference(x, w1, b1, w2, b2):
    # plain-JAX reference mirroring the PyTorch forward (b2 kept: result is identical).
    h = jnp.tanh(jnp.einsum("ac,bct->bat", w1, x) + b1[None, :, None])
    logits = jnp.einsum("ca,bat->bct", w2, h) + b2[None, :, None]
    w = jax.nn.softmax(logits, axis=2)
    mu = jnp.sum(x * w, axis=2)
    rh = jnp.sqrt(jnp.maximum(jnp.sum(x * x * w, axis=2) - mu * mu, 1e-5))
    return jnp.concatenate([mu, rh], axis=1)


if __name__ == "__main__":
    B, C, A, T = 2, 16, 32, 24  # batch, channels, attention_channels, time

    key = jax.random.PRNGKey(0)
    kx, k1, kb1, k2, kb2 = jax.random.split(key, 5)

    x = jax.random.normal(kx, (B, C, T), dtype=jnp.float32)

    # deterministic parameter init (Conv1d k=1 weights collapse to 2-D matrices)
    bound1 = 1.0 / jnp.sqrt(jnp.float32(C))
    bound2 = 1.0 / jnp.sqrt(jnp.float32(A))
    w1 = jax.random.uniform(k1, (A, C), jnp.float32, -bound1, bound1)
    b1 = jax.random.uniform(kb1, (A,), jnp.float32, -bound1, bound1)
    w2 = jax.random.uniform(k2, (C, A), jnp.float32, -bound2, bound2)
    b2 = jax.random.uniform(kb2, (C,), jnp.float32, -bound2, bound2)

    ref = reference(x, w1, b1, w2, b2)

    # 1) exact-math validation (f32 DMA path) — tight tolerance vs f32 reference.
    out_f32 = jax.block_until_ready(
        attentive_statistics_pooling(x, w1, b1, w2, b2, compute_dtype=jnp.float32))
    assert out_f32.shape == (B, 2 * C)
    assert jnp.allclose(out_f32, ref, atol=1e-4, rtol=1e-4), "f32 path mismatch vs reference"

    # 2) fast path (bf16 x/weights DMA, f32 accumulation) — tolerance reflects bf16 input
    #    quantization only; the softmax/statistics math itself is f32.
    out_bf16 = jax.block_until_ready(attentive_statistics_pooling(x, w1, b1, w2, b2))
    assert out_bf16.shape == (B, 2 * C)
    assert jnp.allclose(out_bf16, ref, atol=3e-2, rtol=3e-2), "bf16 path mismatch vs reference"

    print("KERNEL_OK")
</pallas_src>

<mosaic_0001>
module attributes {stable_mosaic.version = 11 : i64} {
  func.func @kernel(%arg0: i32, %arg1: i32, %arg2: memref<1x24x16xf32, #tpu.memory_space<vmem>>, %arg3: memref<16x32xf32, #tpu.memory_space<vmem>>, %arg4: memref<1x32xf32, #tpu.memory_space<vmem>>, %arg5: memref<32x16xf32, #tpu.memory_space<vmem>>, %arg6: memref<1x2x16xf32, #tpu.memory_space<vmem>>, %arg7: memref<1x1x16xf32, #tpu.memory_space<vmem>>, %arg8: memref<1x1x16xf32, #tpu.memory_space<vmem>>, %arg9: memref<1x1x16xf32, #tpu.memory_space<vmem>>, %arg10: memref<1x1x16xf32, #tpu.memory_space<vmem>>) attributes {dimension_semantics = [#tpu.dimension_semantics<parallel>, #tpu.dimension_semantics<arbitrary>], iteration_bounds = array<i64: 2, 1>, scalar_prefetch = 0 : i64, scratch_operands = 4 : i64, tpu.core_type = #tpu.core_type<tc>, window_params = [{transform_indices = @transform_0, window_bounds = array<i64: 1, 24, 16>}, {pipeline_mode = #tpu.pipeline_mode<synchronous>, transform_indices = @transform_1, window_bounds = array<i64: 16, 32>}, {pipeline_mode = #tpu.pipeline_mode<synchronous>, transform_indices = @transform_2, window_bounds = array<i64: 1, 32>}, {pipeline_mode = #tpu.pipeline_mode<synchronous>, transform_indices = @transform_3, window_bounds = array<i64: 32, 16>}, {transform_indices = @transform_4, window_bounds = array<i64: 1, 2, 16>}]} {
    %c0_i32 = arith.constant 0 : i32
    %0 = arith.cmpi eq, %arg1, %c0_i32 : i32
    %1 = arith.extui %0 : i1 to i32
    %c0_i32_0 = arith.constant 0 : i32
    %2 = arith.cmpi ne, %1, %c0_i32_0 : i32
    scf.if %2 {
      %cst_40 = arith.constant 0xFF800000 : f32
      %47 = vector.broadcast %cst_40 : f32 to vector<1x1x16xf32>
      %c0_41 = arith.constant 0 : index
      %c0_42 = arith.constant 0 : index
      %c0_43 = arith.constant 0 : index
      %48 = vector.load %arg7[%c0_41, %c0_42, %c0_43] : memref<1x1x16xf32, #tpu.memory_space<vmem>>, vector<1x1x16xf32>
      tpu.vector_store %arg7[%c0_41, %c0_42, %c0_43], %47 {strides = array<i32>} : memref<1x1x16xf32, #tpu.memory_space<vmem>>, vector<1x1x16xf32>,
      %cst_44 = arith.constant 0.000000e+00 : f32
      %49 = vector.broadcast %cst_44 : f32 to vector<1x1x16xf32>
      %c0_45 = arith.constant 0 : index
      %c0_46 = arith.constant 0 : index
      %c0_47 = arith.constant 0 : index
      %50 = vector.load %arg8[%c0_45, %c0_46, %c0_47] : memref<1x1x16xf32, #tpu.memory_space<vmem>>, vector<1x1x16xf32>
      tpu.vector_store %arg8[%c0_45, %c0_46, %c0_47], %49 {strides = array<i32>} : memref<1x1x16xf32, #tpu.memory_space<vmem>>, vector<1x1x16xf32>,
      %cst_48 = arith.constant 0.000000e+00 : f32
      %51 = vector.broadcast %cst_48 : f32 to vector<1x1x16xf32>
      %c0_49 = arith.constant 0 : index
      %c0_50 = arith.constant 0 : index
      %c0_51 = arith.constant 0 : index
      %52 = vector.load %arg9[%c0_49, %c0_50, %c0_51] : memref<1x1x16xf32, #tpu.memory_space<vmem>>, vector<1x1x16xf32>
      tpu.vector_store %arg9[%c0_49, %c0_50, %c0_51], %51 {strides = array<i32>} : memref<1x1x16xf32, #tpu.memory_space<vmem>>, vector<1x1x16xf32>,
      %cst_52 = arith.constant 0.000000e+00 : f32
      %53 = vector.broadcast %cst_52 : f32 to vector<1x1x16xf32>
      %c0_53 = arith.constant 0 : index
      %c0_54 = arith.constant 0 : index
      %c0_55 = arith.constant 0 : index
      %54 = vector.load %arg10[%c0_53, %c0_54, %c0_55] : memref<1x1x16xf32, #tpu.memory_space<vmem>>, vector<1x1x16xf32>
      tpu.vector_store %arg10[%c0_53, %c0_54, %c0_55], %53 {strides = array<i32>} : memref<1x1x16xf32, #tpu.memory_space<vmem>>, vector<1x1x16xf32>,
    } else {
    }
    %c0 = arith.constant 0 : index
    %c0_1 = arith.constant 0 : index
    %c0_2 = arith.constant 0 : index
    %3 = vector.load %arg2[%c0, %c0_1, %c0_2] : memref<1x24x16xf32, #tpu.memory_space<vmem>>, vector<1x24x16xf32>
    %4 = vector.shape_cast %3 : vector<1x24x16xf32> to vector<24x16xf32>
    %c0_3 = arith.constant 0 : index
    %c0_4 = arith.constant 0 : index
    %5 = vector.load %arg3[%c0_3, %c0_4] : memref<16x32xf32, #tpu.memory_space<vmem>>, vector<16x32xf32>
    %cst = arith.constant dense<0.000000e+00> : vector<24x32xf32>
    %6 = tpu.matmul %4, %5, %cst {dimension_numbers = #tpu.dot_dimension_numbers<[1], [0], [0], [1], [0, 0, 1, 1], [], []>} : vector<24x16xf32>, vector<16x32xf32>, vector<24x32xf32> -> vector<24x32xf32>
    %c0_5 = arith.constant 0 : index
    %c0_6 = arith.constant 0 : index
    %7 = vector.load %arg4[%c0_5, %c0_6] : memref<1x32xf32, #tpu.memory_space<vmem>>, vector<1x32xf32>
    %8 = vector.broadcast %7 : vector<1x32xf32> to vector<24x32xf32>
    %9 = arith.addf %6, %8 : vector<24x32xf32>
    %10 = math.tanh %9 : vector<24x32xf32>
    %c0_7 = arith.constant 0 : index
    %c0_8 = arith.constant 0 : index
    %11 = vector.load %arg5[%c0_7, %c0_8] : memref<32x16xf32, #tpu.memory_space<vmem>>, vector<32x16xf32>
    %cst_9 = arith.constant dense<0.000000e+00> : vector<24x16xf32>
    %12 = tpu.matmul %10, %11, %cst_9 {dimension_numbers = #tpu.dot_dimension_numbers<[1], [0], [0], [1], [0, 0, 1, 1], [], []>} : vector<24x32xf32>, vector<32x16xf32>, vector<24x16xf32> -> vector<24x16xf32>
    %13 = vector.shape_cast %12 : vector<24x16xf32> to vector<1x24x16xf32>
    %c0_10 = arith.constant 0 : index
    %c0_11 = arith.constant 0 : index
    %c0_12 = arith.constant 0 : index
    %14 = vector.load %arg7[%c0_10, %c0_11, %c0_12] : memref<1x1x16xf32, #tpu.memory_space<vmem>>, vector<1x1x16xf32>
    %cst_13 = arith.constant dense<0xFF800000> : vector<1x16xf32>
    %15 = vector.multi_reduction <maximumf>, %13, %cst_13 [1] : vector<1x24x16xf32> to vector<1x16xf32>
    %16 = vector.shape_cast %15 : vector<1x16xf32> to vector<1x1x16xf32>
    %17 = arith.maximumf %14, %16 : vector<1x1x16xf32>
    %18 = arith.subf %14, %17 : vector<1x1x16xf32>
    %19 = math.exp %18 : vector<1x1x16xf32>
    %20 = vector.broadcast %17 : vector<1x1x16xf32> to vector<1x24x16xf32>
    %21 = arith.subf %13, %20 : vector<1x24x16xf32>
    %22 = math.exp %21 : vector<1x24x16xf32>
    %23 = arith.mulf %3, %22 : vector<1x24x16xf32>
    %c0_14 = arith.constant 0 : index
    %c0_15 = arith.constant 0 : index
    %c0_16 = arith.constant 0 : index
    %24 = vector.load %arg8[%c0_14, %c0_15, %c0_16] : memref<1x1x16xf32, #tpu.memory_space<vmem>>, vector<1x1x16xf32>
    %25 = arith.mulf %19, %24 : vector<1x1x16xf32>
    %cst_17 = arith.constant dense<0.000000e+00> : vector<1x16xf32>
    %26 = vector.multi_reduction <add>, %22, %cst_17 [1] : vector<1x24x16xf32> to vector<1x16xf32>
    %27 = vector.shape_cast %26 : vector<1x16xf32> to vector<1x1x16xf32>
    %28 = arith.addf %25, %27 : vector<1x1x16xf32>
    %c0_18 = arith.constant 0 : index
    %c0_19 = arith.constant 0 : index
    %c0_20 = arith.constant 0 : index
    %29 = vector.load %arg8[%c0_18, %c0_19, %c0_20] : memref<1x1x16xf32, #tpu.memory_space<vmem>>, vector<1x1x16xf32>
    tpu.vector_store %arg8[%c0_18, %c0_19, %c0_20], %28 {strides = array<i32>} : memref<1x1x16xf32, #tpu.memory_space<vmem>>, vector<1x1x16xf32>,
    %c0_21 = arith.constant 0 : index
    %c0_22 = arith.constant 0 : index
    %c0_23 = arith.constant 0 : index
    %30 = vector.load %arg9[%c0_21, %c0_22, %c0_23] : memref<1x1x16xf32, #tpu.memory_space<vmem>>, vector<1x1x16xf32>
    %31 = arith.mulf %19, %30 : vector<1x1x16xf32>
    %cst_24 = arith.constant dense<0.000000e+00> : vector<1x16xf32>
    %32 = vector.multi_reduction <add>, %23, %cst_24 [1] : vector<1x24x16xf32> to vector<1x16xf32>
    %33 = vector.shape_cast %32 : vector<1x16xf32> to vector<1x1x16xf32>
    %34 = arith.addf %31, %33 : vector<1x1x16xf32>
    %c0_25 = arith.constant 0 : index
    %c0_26 = arith.constant 0 : index
    %c0_27 = arith.constant 0 : index
    %35 = vector.load %arg9[%c0_25, %c0_26, %c0_27] : memref<1x1x16xf32, #tpu.memory_space<vmem>>, vector<1x1x16xf32>
    tpu.vector_store %arg9[%c0_25, %c0_26, %c0_27], %34 {strides = array<i32>} : memref<1x1x16xf32, #tpu.memory_space<vmem>>, vector<1x1x16xf32>,
    %c0_28 = arith.constant 0 : index
    %c0_29 = arith.constant 0 : index
    %c0_30 = arith.constant 0 : index
    %36 = vector.load %arg10[%c0_28, %c0_29, %c0_30] : memref<1x1x16xf32, #tpu.memory_space<vmem>>, vector<1x1x16xf32>
    %37 = arith.mulf %19, %36 : vector<1x1x16xf32>
    %38 = arith.mulf %3, %23 : vector<1x24x16xf32>
    %cst_31 = arith.constant dense<0.000000e+00> : vector<1x16xf32>
    %39 = vector.multi_reduction <add>, %38, %cst_31 [1] : vector<1x24x16xf32> to vector<1x16xf32>
    %40 = vector.shape_cast %39 : vector<1x16xf32> to vector<1x1x16xf32>
    %41 = arith.addf %37, %40 : vector<1x1x16xf32>
    %c0_32 = arith.constant 0 : index
    %c0_33 = arith.constant 0 : index
    %c0_34 = arith.constant 0 : index
    %42 = vector.load %arg10[%c0_32, %c0_33, %c0_34] : memref<1x1x16xf32, #tpu.memory_space<vmem>>, vector<1x1x16xf32>
    tpu.vector_store %arg10[%c0_32, %c0_33, %c0_34], %41 {strides = array<i32>} : memref<1x1x16xf32, #tpu.memory_space<vmem>>, vector<1x1x16xf32>,
    %c0_35 = arith.constant 0 : index
    %c0_36 = arith.constant 0 : index
    %c0_37 = arith.constant 0 : index
    %43 = vector.load %arg7[%c0_35, %c0_36, %c0_37] : memref<1x1x16xf32, #tpu.memory_space<vmem>>, vector<1x1x16xf32>
    tpu.vector_store %arg7[%c0_35, %c0_36, %c0_37], %17 {strides = array<i32>} : memref<1x1x16xf32, #tpu.memory_space<vmem>>, vector<1x1x16xf32>,
    %c0_i32_38 = arith.constant 0 : i32
    %44 = arith.cmpi eq, %arg1, %c0_i32_38 : i32
    %45 = arith.extui %44 : i1 to i32
    %c0_i32_39 = arith.constant 0 : i32
    %46 = arith.cmpi ne, %45, %c0_i32_39 : i32
    scf.if %46 {
      %c0_40 = arith.constant 0 : index
      %c0_41 = arith.constant 0 : index
      %c0_42 = arith.constant 0 : index
      %47 = vector.load %arg8[%c0_40, %c0_41, %c0_42] : memref<1x1x16xf32, #tpu.memory_space<vmem>>, vector<1x1x16xf32>
      %cst_43 = arith.constant 1.000000e+00 : f32
      %48 = vector.broadcast %cst_43 : f32 to vector<1x1x16xf32>
      %49 = arith.divf %48, %47 : vector<1x1x16xf32>
      %c0_44 = arith.constant 0 : index
      %c0_45 = arith.constant 0 : index
      %c0_46 = arith.constant 0 : index
      %50 = vector.load %arg9[%c0_44, %c0_45, %c0_46] : memref<1x1x16xf32, #tpu.memory_space<vmem>>, vector<1x1x16xf32>
      %51 = arith.mulf %50, %49 : vector<1x1x16xf32>
      %c0_47 = arith.constant 0 : index
      %c0_48 = arith.constant 0 : index
      %c0_49 = arith.constant 0 : index
      %52 = vector.load %arg10[%c0_47, %c0_48, %c0_49] : memref<1x1x16xf32, #tpu.memory_space<vmem>>, vector<1x1x16xf32>
      %53 = arith.mulf %52, %49 : vector<1x1x16xf32>
      %54 = arith.mulf %51, %51 : vector<1x1x16xf32>
      %55 = arith.subf %53, %54 : vector<1x1x16xf32>
      %cst_50 = arith.constant 9.99999974E-6 : f32
      %56 = vector.broadcast %cst_50 : f32 to vector<1x1x16xf32>
      %57 = arith.maximumf %55, %56 : vector<1x1x16xf32>
      %58 = math.sqrt %57 : vector<1x1x16xf32>
      %59 = tpu.concatenate %51, %58 in 1 : vector<1x1x16xf32>, vector<1x1x16xf32> -> vector<1x2x16xf32>
      %c0_51 = arith.constant 0 : index
      %c0_52 = arith.constant 0 : index
      %c0_53 = arith.constant 0 : index
      %60 = vector.load %arg6[%c0_51, %c0_52, %c0_53] : memref<1x2x16xf32, #tpu.memory_space<vmem>>, vector<1x2x16xf32>
      tpu.vector_store %arg6[%c0_51, %c0_52, %c0_53], %59 {strides = array<i32>} : memref<1x2x16xf32, #tpu.memory_space<vmem>>, vector<1x2x16xf32>,
    } else {
    }
    return
  }
  func.func @transform_0(%arg0: i32, %arg1: i32) -> (i32, i32, i32) {
    %c0_i32 = arith.constant 0 : i32
    %c0_i32_0 = arith.constant 0 : i32
    return %arg0, %arg1, %c0_i32 : i32, i32, i32
  }
  func.func @transform_1(%arg0: i32, %arg1: i32) -> (i32, i32) {
    %c0_i32 = arith.constant 0 : i32
    %c0_i32_0 = arith.constant 0 : i32
    %c0_i32_1 = arith.constant 0 : i32
    return %c0_i32, %c0_i32_0 : i32, i32
  }
  func.func @transform_2(%arg0: i32, %arg1: i32) -> (i32, i32) {
    %c0_i32 = arith.constant 0 : i32
    %c0_i32_0 = arith.constant 0 : i32
    %c0_i32_1 = arith.constant 0 : i32
    return %c0_i32, %c0_i32_0 : i32, i32
  }
  func.func @transform_3(%arg0: i32, %arg1: i32) -> (i32, i32) {
    %c0_i32 = arith.constant 0 : i32
    %c0_i32_0 = arith.constant 0 : i32
    %c0_i32_1 = arith.constant 0 : i32
    return %c0_i32, %c0_i32_0 : i32, i32
  }
  func.func @transform_4(%arg0: i32, %arg1: i32) -> (i32, i32, i32) {
    %c0_i32 = arith.constant 0 : i32
    %c0_i32_0 = arith.constant 0 : i32
    %c0_i32_1 = arith.constant 0 : i32
    return %arg0, %c0_i32, %c0_i32_0 : i32, i32, i32
  }
}

</mosaic_0001>

<llo_original>
// kernel: tpu_custom_call.1
$region0: #{tpu_custom_call.1}
  #allocation0 [shape = 'u32[]', space=smem, size = 0x4, offset = 0x4, fixed_abs, tag = 'smem constant byte address 0x4 - core index']
  #allocation1 [shape = 'u32[144,128]{1,0:T(1,128)}', space=vmem, size = 0x12000, scoped, tag = 'internal scratch']
  #allocation2 [shape = 'f32[1,1,16]{2,1,0:T(1,128)}', space=vmem, size = 0x200, scoped, tag = 'scratch operand']
  #allocation3 [shape = 'f32[1,1,16]{2,1,0:T(1,128)}', space=vmem, size = 0x200, scoped, tag = 'scratch operand']
  #allocation4 [shape = 'f32[1,1,16]{2,1,0:T(1,128)}', space=vmem, size = 0x200, scoped, tag = 'scratch operand']
  #allocation5 [shape = 'f32[1,1,16]{2,1,0:T(1,128)}', space=vmem, size = 0x200, scoped, tag = 'scratch operand']
  %s0 = inlined_call_operand.vmem [shape: f32[2,24,16], index: 0, kind: input, shape index: {}]
  %s1 = inlined_call_operand.vmem [shape: f32[16,32], index: 1, kind: input, shape index: {}]
  %s2 = inlined_call_operand.vmem [shape: f32[1,32], index: 2, kind: input, shape index: {}]
  %s3 = inlined_call_operand.vmem [shape: f32[32,16], index: 3, kind: input, shape index: {}]
  %s4 = inlined_call_operand.hbm [shape: f32[2,2,16], index: 4, kind: output, shape index: {}]
  %s5 = sld [smem:[#allocation0]]
  $region57: #{tpu_custom_call.1} parent=0
    _
  %s7 = ssub.s32 1, %s5
  %s8 = scalar_select 0, %s7, %s5
  $region1: #{tpu_custom_call.1} parent=0
    #allocation6 [shape = 'u8[2048]{0}', space=vmem, size = 0x800, scoped, tag = 'output window, operand 0']
    #allocation7 [shape = 's32[2]{0}', space=sflag, size = 0x8, scoped, tag = 'scoped memory for tpu_custom_call.1']
    %9 = vsyncpa [#allocation7], 0
    %s10 = scalar_lea.sflag [#allocation7], 1
    %11 = vsyncpa %s10, 0
    loop: start=0, step=1, limit=4
    $region2: #{tpu_custom_call.1} parent=1 // loop_pre_header
      _
    $region3: #{tpu_custom_call.1} parent=1 // loop_header
      %s13 = sphi 0, %s17
      %p14 = scmp.ge.s32.totalorder %s13, 4
      %s20 = sphi 0, %s32
      %s21 = sphi 0, %s28
      %s22 = sphi 0, %s20
      %s23 = sphi 0, %s21
      %s24 = sphi 0, %s22
      %s25 = sphi 0, %s23
      %s37 = sphi 0, %s39
      %s40 = sphi 0, %s37
      %s41 = sphi 0, %s40
      %s57 = sphi 0, %s41
      %s61 = sphi 0, %s61
      %s63 = sphi 0, %s61
      %s64 = sphi 0, %s63
      %s78 = sphi 0, %s64
      %s82 = sphi 0, %s82
      %s84 = sphi 0, %s82
      %s85 = sphi 0, %s84
      %s99 = sphi 0, %s85
      %s103 = sphi 0, %s103
      %s105 = sphi 0, %s103
      %s106 = sphi 0, %s105
      %s120 = sphi 0, %s106
      %s126 = sphi 0, %s128
      %s129 = sphi 0, %s126
      %s130 = sphi 0, %s129
      %s146 = sphi 0, %s130
    $region4: #{tpu_custom_call.1} parent=1 // loop_header_branch
      %16 = sbr.rel (%p14) target = $region8
    $region5: #{tpu_custom_call.1} parent=1 // loop_body
      %s18 = ssub.s32 %s13, 1
      %s19 = ssub.s32 %s13, 2
      %s26 = sadd.s32 1, %s21
      %p27 = scmp.ge.s32.totalorder %s26, 1
      %s28 = scalar_select %p27, 0, %s26
      %s29 = sadd.s32 1, %s20
      %s30 = scalar_select %p27, %s29, %s20
      %p31 = scmp.ge.s32.totalorder %s30, 2
      %s32 = scalar_select %p31, 0, %s30
      %s33 = ssub.s32 %s20, %s32
      %s34 = ssub.s32 %s21, %s28
      %s35 = sor.u32 %s33, %s34
      %p36 = scmp.eq.s32.totalorder %s35, 0
      %s38 = sadd.s32 %s37, 1
      %s39 = scalar_select %p36, %s37, %s38
      %p42 = pneg %p36
      %p43 = scmp.eq.s32.totalorder %s13, 1
      %p44 = por %p42, %p43
      %p45 = scmp.ne.s32.totalorder %s37, %s40
      %p46 = scmp.eq.s32.totalorder %s13, 0
      %p47 = por %p45, %p46
      %p48 = scmp.ne.s32.totalorder %s37, %s40
      %p49 = scmp.eq.s32.totalorder %s18, 1
      %p50 = por %p48, %p49
      %p51 = scmp.ne.s32.totalorder %s40, %s41
      %p52 = scmp.eq.s32.totalorder %s18, 0
      %p53 = por %p51, %p52
      %p54 = scmp.ne.s32.totalorder %s40, %s41
      %p55 = scmp.eq.s32.totalorder %s19, 1
      %p56 = por %p54, %p55
      %p58 = scmp.ne.s32.totalorder %s41, %s57
      %p59 = scmp.eq.s32.totalorder %s19, 0
      %p60 = por %p58, %p59
      %s62 = sadd.s32 %s61, 1
      %p65 = scmp.eq.s32.totalorder %s13, 1
      %p66 = scmp.ne.s32.totalorder %s61, %s63
      %p67 = scmp.eq.s32.totalorder %s13, 0
      %p68 = por %p66, %p67
      %p69 = scmp.ne.s32.totalorder %s61, %s63
      %p70 = scmp.eq.s32.totalorder %s18, 1
      %p71 = por %p69, %p70
      %p72 = scmp.ne.s32.totalorder %s63, %s64
      %p73 = scmp.eq.s32.totalorder %s18, 0
      %p74 = por %p72, %p73
      %p75 = scmp.ne.s32.totalorder %s63, %s64
      %p76 = scmp.eq.s32.totalorder %s19, 1
      %p77 = por %p75, %p76
      %p79 = scmp.ne.s32.totalorder %s64, %s78
      %p80 = scmp.eq.s32.totalorder %s19, 0
      %p81 = por %p79, %p80
      %s83 = sadd.s32 %s82, 1
      %p86 = scmp.eq.s32.totalorder %s13, 1
      %p87 = scmp.ne.s32.totalorder %s82, %s84
      %p88 = scmp.eq.s32.totalorder %s13, 0
      %p89 = por %p87, %p88
      %p90 = scmp.ne.s32.totalorder %s82, %s84
      %p91 = scmp.eq.s32.totalorder %s18, 1
      %p92 = por %p90, %p91
      %p93 = scmp.ne.s32.totalorder %s84, %s85
      %p94 = scmp.eq.s32.totalorder %s18, 0
      %p95 = por %p93, %p94
      %p96 = scmp.ne.s32.totalorder %s84, %s85
      %p97 = scmp.eq.s32.totalorder %s19, 1
      %p98 = por %p96, %p97
      %p100 = scmp.ne.s32.totalorder %s85, %s99
      %p101 = scmp.eq.s32.totalorder %s19, 0
      %p102 = por %p100, %p101
      %s104 = sadd.s32 %s103, 1
      %p107 = scmp.eq.s32.totalorder %s13, 1
      %p108 = scmp.ne.s32.totalorder %s103, %s105
      %p109 = scmp.eq.s32.totalorder %s13, 0
      %p110 = por %p108, %p109
      %p111 = scmp.ne.s32.totalorder %s103, %s105
      %p112 = scmp.eq.s32.totalorder %s18, 1
      %p113 = por %p111, %p112
      %p114 = scmp.ne.s32.totalorder %s105, %s106
      %p115 = scmp.eq.s32.totalorder %s18, 0
      %p116 = por %p114, %p115
      %p117 = scmp.ne.s32.totalorder %s105, %s106
      %p118 = scmp.eq.s32.totalorder %s19, 1
      %p119 = por %p117, %p118
      %p121 = scmp.ne.s32.totalorder %s106, %s120
      %p122 = scmp.eq.s32.totalorder %s19, 0
      %p123 = por %p121, %p122
      %s124 = ssub.s32 %s20, %s32
      %p125 = scmp.eq.s32.totalorder %s124, 0
      %s127 = sadd.s32 %s126, 1
      %s128 = scalar_select %p125, %s126, %s127
      %p131 = pneg %p125
      %p132 = scmp.eq.s32.totalorder %s13, 1
      %p133 = por %p131, %p132
      %p134 = scmp.ne.s32.totalorder %s126, %s129
      %p135 = scmp.eq.s32.totalorder %s13, 0
      %p136 = por %p134, %p135
      %p137 = scmp.ne.s32.totalorder %s126, %s129
      %p138 = scmp.eq.s32.totalorder %s18, 1
      %p139 = por %p137, %p138
      %p140 = scmp.ne.s32.totalorder %s129, %s130
      %p141 = scmp.eq.s32.totalorder %s18, 0
      %p142 = por %p140, %p141
      %p143 = scmp.ne.s32.totalorder %s129, %s130
      %p144 = scmp.eq.s32.totalorder %s19, 1
      %p145 = por %p143, %p144
      %p147 = scmp.ne.s32.totalorder %s130, %s146
      %p148 = scmp.eq.s32.totalorder %s19, 0
      %p149 = por %p147, %p148
      %p150 = scmp.le.s32.totalorder 1, %s13
      %p151 = scmp.lt.s32.totalorder %s13, 3
      %p152 = pnand %p150, %p151
      %p153 = pneg %p152
      // Predicated region
      $region9: #{tpu_custom_call.1} parent=5 // pred_check
        _
      $region10: #{tpu_custom_call.1} parent=5 // pred_check_branch
        %155 = sbr.rel (%p152) target = $region12
      $region11: #{tpu_custom_call.1} parent=5 // pred_region
        %s156 = ssub.s32 %s13, 1
        // Predicated region
        $region13: #{tpu_custom_call.1} parent=11 // pred_check
          %p157 = pneg %p74
        $region14: #{tpu_custom_call.1} parent=11 // pred_check_branch
          %159 = sbr.rel (%p157) target = $region16
        $region15: #{tpu_custom_call.1} parent=11 // pred_region
          _
        $region16: #{tpu_custom_call.1} parent=11 // pred_fallthru
          _
        // Predicated region
        $region17: #{tpu_custom_call.1} parent=11 // pred_check
          %p160 = pneg %p95
        $region18: #{tpu_custom_call.1} parent=11 // pred_check_branch
          %162 = sbr.rel (%p160) target = $region20
        $region19: #{tpu_custom_call.1} parent=11 // pred_region
          _
        $region20: #{tpu_custom_call.1} parent=11 // pred_fallthru
          _
        // Predicated region
        $region21: #{tpu_custom_call.1} parent=11 // pred_check
          %p163 = pneg %p116
        $region22: #{tpu_custom_call.1} parent=11 // pred_check_branch
          %165 = sbr.rel (%p163) target = $region24
        $region23: #{tpu_custom_call.1} parent=11 // pred_region
          _
        $region24: #{tpu_custom_call.1} parent=11 // pred_fallthru
          _
      $region12: #{tpu_custom_call.1} parent=5 // pred_fallthru
        _
      %p166 = scmp.lt.s32.totalorder %s13, 2
      // Predicated region
      $region25: #{tpu_custom_call.1} parent=5 // pred_check
        %p167 = pneg %p166
      $region26: #{tpu_custom_call.1} parent=5 // pred_check_branch
        %169 = sbr.rel (%p167) target = $region28
      $region27: #{tpu_custom_call.1} parent=5 // pred_region
        // Predicated region
        $region29: #{tpu_custom_call.1} parent=27 // pred_check
          %p170 = pneg %p47
        $region30: #{tpu_custom_call.1} parent=27 // pred_check_branch
          %172 = sbr.rel (%p170) target = $region32
        $region31: #{tpu_custom_call.1} parent=27 // pred_region
          %s173 = smul.u32 3, %s21
          %p174 = scmp.lt.s32.totalorder %s20, 1
          %s175 = scalar_select %p174, %s20, 1
          %p176 = scmp.lt.s32.totalorder %s173, 2
          %s177 = scalar_select %p176, %s173, 2
          %s178 = smul.addr %s175, 3
          %s179 = sadd.s32 %s177, %s178
          %s180 = smul.addr %s179, 8
          %s181 = scalar_lea.vmem %s0, %s180
          %s182 = smul.u32 3, %s21
        $region32: #{tpu_custom_call.1} parent=27 // pred_fallthru
          _
      $region28: #{tpu_custom_call.1} parent=5 // pred_fallthru
        _
      %p183 = scmp.le.s32.totalorder 1, %s13
      %p184 = scmp.lt.s32.totalorder %s13, 3
      %p185 = pnand %p183, %p184
      %p186 = pneg %p185
      // Predicated region
      $region33: #{tpu_custom_call.1} parent=5 // pred_check
        _
      $region34: #{tpu_custom_call.1} parent=5 // pred_check_branch
        %188 = sbr.rel (%p185) target = $region36
      $region35: #{tpu_custom_call.1} parent=5 // pred_region
        %s189 = ssub.s32 %s13, 1
        %s190 = smul.u32 3, %s23
        %p191 = scmp.lt.s32.totalorder %s22, 1
        %s192 = scalar_select %p191, %s22, 1
        %p193 = scmp.lt.s32.totalorder %s190, 2
        %s194 = scalar_select %p193, %s190, 2
        %s195 = smul.addr %s192, 3
        %s196 = sadd.s32 %s194, %s195
        %s197 = smul.addr %s196, 8
        %s198 = scalar_lea.vmem %s0, %s197
        %p199 = pneg %p53
        %p200 = pneg %p50
        %p201 = pneg %p74
        %p202 = pneg %p71
        %p203 = pneg %p95
        %p204 = pneg %p92
        %p205 = pneg %p116
        %p206 = pneg %p113
        %p207 = pneg %p142
        %p208 = pneg %p139
        %s209 = sand.u32 %s129, 1
        %s210 = scalar_lea.sflag [#allocation7], %s209
        %s211 = sand.u32 %s129, 1
        %s212 = smul.addr %s211, 2
        %s213 = scalar_lea.vmem [#allocation6], %s212
        %s214 = smul.u32 3, %s23
        %p215 = scmp.lt.s32.totalorder %s22, 1
        %s216 = scalar_select %p215, %s22, 1
        %p217 = scmp.lt.s32.totalorder %s214, 2
        %s218 = scalar_select %p217, %s214, 2
        %s219 = smul.addr %s216, 3
        %s220 = sadd.s32 %s218, %s219
        %s221 = smul.addr %s220, 8
        %s222 = scalar_lea.vmem %s0, %s221
        %s223 = smul.u32 3, %s23
        %p224 = scmp.eq.s32.totalorder %s23, 0
        // Predicated region
        $region37: #{tpu_custom_call.1} parent=35 // pred_check
          %p225 = pneg %p224
        $region38: #{tpu_custom_call.1} parent=35 // pred_check_branch
          %227 = sbr.rel (%p225) target = $region40
        $region39: #{tpu_custom_call.1} parent=35 // pred_region
          %vm228 = vcmask 122880
          %229 = vst.msk [vmem:[#allocation2] sm:$0x1] %vm228, -inf
          %230 = vst.msk [vmem:[#allocation3] sm:$0x1] %vm228, 0.0
          %231 = vst.msk [vmem:[#allocation4] sm:$0x1] %vm228, 0.0
          %232 = vst.msk [vmem:[#allocation5] sm:$0x1] %vm228, 0.0
        $region40: #{tpu_custom_call.1} parent=35 // pred_fallthru
          _
        %v233 = vld [vmem:[%s222] sm:$0xff]
        %v234 = vld [vmem:[%s222 + $0x8] sm:$0xff]
        %v235 = vld [vmem:[%s222 + $0x10] sm:$0xff]
        %v236 = vld [vmem:[%s1] sm:$0xff]
        %v237 = vld [vmem:[%s1 + $0x8] sm:$0xff]
        %v238 = vld [vmem:[%s2] sm:$0x1]
        %v240 = vlaneseq
        %v241 = vshrl.u32 %v240, 7
        %v242 = vsub.s32 0, %v241
        %v243 = vrot.slane %v238, %v242
        %vm245 = vcmask 130048
        %v247 = vsel %vm245, %v233, 0
        %v250 = vsel %vm245, %v234, 0
        %v253 = vsel %vm245, %v235, 0
        %255 = vmatprep.subr.mxu0 0.0
        %256 = vmatpush1.msra.mxu0 %v236
        %257 = vmatprep.subr.mxu0 0.0
        %258 = vmatpush1.msra.mxu0 %v237
        %259 = vmatprep.subr.mxu0 0.0
        %260 = vmatpush1.msra.mxu0 0.0
        %261 = vmatprep.subr.mxu0 0.0
        %262 = vmatpush1.msra.mxu0 0.0
        %263 = vmatprep.subr.mxu0 0.0
        %264 = vmatpush1.msra.mxu0 0.0
        %265 = vmatprep.subr.mxu0 0.0
        %266 = vmatpush1.msra.mxu0 0.0
        %267 = vmatprep.subr.mxu0 0.0
        %268 = vmatpush1.msra.mxu0 0.0
        %269 = vmatprep.subr.mxu0 0.0
        %270 = vmatpush1.msra.mxu0 0.0
        %271 = vmatprep.subr.mxu0 0.0
        %272 = vmatpush1.msra.mxu0 0.0
        %273 = vmatprep.subr.mxu0 0.0
        %274 = vmatpush1.msra.mxu0 0.0
        %275 = vmatprep.subr.mxu0 0.0
        %276 = vmatpush1.msra.mxu0 0.0
        %277 = vmatprep.subr.mxu0 0.0
        %278 = vmatpush1.msra.mxu0 0.0
        %279 = vmatprep.subr.mxu0 0.0
        %280 = vmatpush1.msra.mxu0 0.0
        %281 = vmatprep.subr.mxu0 0.0
        %282 = vmatpush1.msra.mxu0 0.0
        %283 = vmatprep.subr.mxu0 0.0
        %284 = vmatpush1.msra.mxu0 0.0
        %285 = vmatprep.subr.mxu0 0.0
        %286 = vmatpush1.msra.mxu0 0.0
        %287 = vmatprep.subr.mxu0 0.0
        %288 = vmatpush1.msra.mxu0 0.0
        %289 = vmatprep.subr.mxu0 0.0
        %290 = vmatpush1.msra.mxu0 0.0
        %291 = vmatprep.subr.mxu0 0.0
        %292 = vmatpush1.msra.mxu0 0.0
        %293 = vmatprep.subr.mxu0 0.0
        %294 = vmatpush1.msra.mxu0 0.0
        %295 = vmatprep.subr.mxu0 0.0
        %296 = vmatpush1.msra.mxu0 0.0
        %297 = vmatprep.subr.mxu0 0.0
        %298 = vmatpush1.msra.mxu0 0.0
        %299 = vmatprep.subr.mxu0 0.0
        %300 = vmatpush1.msra.mxu0 0.0
        %301 = vmatprep.subr.mxu0 0.0
        %302 = vmatpush1.msra.mxu0 0.0
        %303 = vmatprep.subr.mxu0 0.0
        %304 = vmatpush1.msra.mxu0 0.0
        %305 = vmatprep.subr.mxu0 0.0
        %306 = vmatpush1.msra.mxu0 0.0
        %307 = vmatprep.subr.mxu0 0.0
        %308 = vmatpush1.msra.mxu0 0.0
        %309 = vmatprep.subr.mxu0 0.0
        %310 = vmatpush1.msra.mxu0 0.0
        %311 = vmatprep.subr.mxu0 0.0
        %312 = vmatpush1.msra.mxu0 0.0
        %313 = vmatprep.subr.mxu0 0.0
        %314 = vmatpush1.msra.mxu0 0.0
        %315 = vmatprep.subr.mxu0 0.0
        %316 = vmatpush1.msra.mxu0 0.0
        %317 = vmatprep.subr.mxu0 0.0
        %318 = vmatpush1.msra.mxu0 0.0
        %319 = vmatprep.mubr.f32.mxu0 0.0
        %320 = vmatmul.mubr.f32.gmra.mrb[0].mxu0 %v247
        %v321 = vpop.f32.mrb[0].mxu0
        %v322 = vadd.f32 %v243, %v321
        %v323 = vpop.f32.mrb[0].mxu0
        %324 = vmatprep.mubr.f32.mxu0 0.0
        %325 = vmatmul.mubr.f32.gmra.mrb[0].mxu0 %v250
        %v326 = vpop.f32.mrb[0].mxu0
        %v327 = vadd.f32 %v243, %v326
        %v328 = vpop.f32.mrb[0].mxu0
        %329 = vmatprep.mubr.f32.mxu0 0.0
        %330 = vmatmul.mubr.f32.gmra.mrb[0].mxu0 %v253
        %v331 = vpop.f32.mrb[0].mxu0
        %v332 = vadd.f32 %v243, %v331
        %v333 = vpop.f32.mrb[0].mxu0
        %334 = vdwg.mxu0
        %v335 = vtanh.pop %v322
        %v336 = vtanh.pop %v327
        %v337 = vtanh.pop %v332
        %v338 = vld [vmem:[%s3] sm:$0xff]
        %v339 = vld [vmem:[%s3 + $0x8] sm:$0xff]
        %v340 = vld [vmem:[%s3 + $0x10] sm:$0xff]
        %v341 = vld [vmem:[%s3 + $0x18] sm:$0xff]
        %vm342 = vcmask 261120
        %v344 = vsel %vm342, %v335, 0
        %v347 = vsel %vm342, %v336, 0
        %v350 = vsel %vm342, %v337, 0
        %352 = vmatprep.subr.mxu0 0.0
        %353 = vmatpush1.msra.mxu0 %v338
        %354 = vmatprep.subr.mxu0 0.0
        %355 = vmatpush1.msra.mxu0 %v339
        %356 = vmatprep.subr.mxu0 0.0
        %357 = vmatpush1.msra.mxu0 %v340
        %358 = vmatprep.subr.mxu0 0.0
        %359 = vmatpush1.msra.mxu0 %v341
        %360 = vmatprep.subr.mxu0 0.0
        %361 = vmatpush1.msra.mxu0 0.0
        %362 = vmatprep.subr.mxu0 0.0
        %363 = vmatpush1.msra.mxu0 0.0
        %364 = vmatprep.subr.mxu0 0.0
        %365 = vmatpush1.msra.mxu0 0.0
        %366 = vmatprep.subr.mxu0 0.0
        %367 = vmatpush1.msra.mxu0 0.0
        %368 = vmatprep.subr.mxu0 0.0
        %369 = vmatpush1.msra.mxu0 0.0
        %370 = vmatprep.subr.mxu0 0.0
        %371 = vmatpush1.msra.mxu0 0.0
        %372 = vmatprep.subr.mxu0 0.0
        %373 = vmatpush1.msra.mxu0 0.0
        %374 = vmatprep.subr.mxu0 0.0
        %375 = vmatpush1.msra.mxu0 0.0
        %376 = vmatprep.subr.mxu0 0.0
        %377 = vmatpush1.msra.mxu0 0.0
        %378 = vmatprep.subr.mxu0 0.0
        %379 = vmatpush1.msra.mxu0 0.0
        %380 = vmatprep.subr.mxu0 0.0
        %381 = vmatpush1.msra.mxu0 0.0
        %382 = vmatprep.subr.mxu0 0.0
        %383 = vmatpush1.msra.mxu0 0.0
        %384 = vmatprep.subr.mxu0 0.0
        %385 = vmatpush1.msra.mxu0 0.0
        %386 = vmatprep.subr.mxu0 0.0
        %387 = vmatpush1.msra.mxu0 0.0
        %388 = vmatprep.subr.mxu0 0.0
        %389 = vmatpush1.msra.mxu0 0.0
        %390 = vmatprep.subr.mxu0 0.0
        %391 = vmatpush1.msra.mxu0 0.0
        %392 = vmatprep.subr.mxu0 0.0
        %393 = vmatpush1.msra.mxu0 0.0
        %394 = vmatprep.subr.mxu0 0.0
        %395 = vmatpush1.msra.mxu0 0.0
        %396 = vmatprep.subr.mxu0 0.0
        %397 = vmatpush1.msra.mxu0 0.0
        %398 = vmatprep.subr.mxu0 0.0
        %399 = vmatpush1.msra.mxu0 0.0
        %400 = vmatprep.subr.mxu0 0.0
        %401 = vmatpush1.msra.mxu0 0.0
        %402 = vmatprep.subr.mxu0 0.0
        %403 = vmatpush1.msra.mxu0 0.0
        %404 = vmatprep.subr.mxu0 0.0
        %405 = vmatpush1.msra.mxu0 0.0
        %406 = vmatprep.subr.mxu0 0.0
        %407 = vmatpush1.msra.mxu0 0.0
        %408 = vmatprep.subr.mxu0 0.0
        %409 = vmatpush1.msra.mxu0 0.0
        %410 = vmatprep.subr.mxu0 0.0
        %411 = vmatpush1.msra.mxu0 0.0
        %412 = vmatprep.subr.mxu0 0.0
        %413 = vmatpush1.msra.mxu0 0.0
        %414 = vmatprep.subr.mxu0 0.0
        %415 = vmatpush1.msra.mxu0 0.0
        %416 = vmatprep.mubr.f32.mxu0 0.0
        %417 = vmatmul.mubr.f32.gmra.mrb[0].mxu0 %v344
        %v418 = vpop.f32.mrb[0].mxu0
        %v419 = vadd.f32 0.0, %v418
        %v420 = vpop.f32.mrb[0].mxu0
        %421 = vmatprep.mubr.f32.mxu0 0.0
        %422 = vmatmul.mubr.f32.gmra.mrb[0].mxu0 %v347
        %v423 = vpop.f32.mrb[0].mxu0
        %v424 = vadd.f32 0.0, %v423
        %v425 = vpop.f32.mrb[0].mxu0
        %426 = vmatprep.mubr.f32.mxu0 0.0
        %427 = vmatmul.mubr.f32.gmra.mrb[0].mxu0 %v350
        %v428 = vpop.f32.mrb[0].mxu0
        %v429 = vadd.f32 0.0, %v428
        %v430 = vpop.f32.mrb[0].mxu0
        %431 = vdwg.mxu0
        %v432 = vld [vmem:[#allocation2] sm:$0x1]
        %v433 = vsel %vm245, %v419, -inf
        %v434 = vsel %vm245, %v424, -inf
        %v435 = vsel %vm245, %v429, -inf
        %v436 = vmax.f32 %v433, %v434
        %v437 = vmax.f32 %v436, %v435
        %v438 = vrot.slane %v437, 4
        %v439 = vmax.f32 %v437, %v438
        %v440 = vrot.slane %v439, 2
        %v441 = vmax.f32 %v439, %v440
        %v442 = vrot.slane %v441, 1
        %v443 = vmax.f32 %v441, %v442
        %v444 = vmax.f32 %v432, %v443
        %v445 = vsub.f32 %v432, %v444
        %v446 = vmul.f32 %v445, 1.442695
        %v447 = vpow.pop %v446
        %v449 = vlaneseq
        %v450 = vshrl.u32 %v449, 7
        %v451 = vsub.s32 0, %v450
        %v452 = vrot.slane %v444, %v451
        %v454 = vsub.f32 %v419, %v452
        %v455 = vsub.f32 %v424, %v452
        %v456 = vsub.f32 %v429, %v452
        %v457 = vmul.f32 %v454, 1.442695
        %v458 = vpow.pop %v457
        %v459 = vmul.f32 %v455, 1.442695
        %v460 = vpow.pop %v459
        %v461 = vmul.f32 %v456, 1.442695
        %v462 = vpow.pop %v461
        %v463 = vmul.f32 %v233, %v458
        %v464 = vmul.f32 %v234, %v460
        %v465 = vmul.f32 %v235, %v462
        %v466 = vld [vmem:[#allocation3] sm:$0x1]
        %v467 = vmul.f32 %v447, %v466
        %v468 = vsel %vm245, %v458, 0.0
        %v469 = vsel %vm245, %v460, 0.0
        %v470 = vadd.f32 %v468, %v469
        %v471 = vsel %vm245, %v462, 0.0
        %v472 = vadd.f32 %v470, %v471
        %v473 = vrot.slane %v472, 4
        %v474 = vadd.f32 %v472, %v473
        %v475 = vrot.slane %v474, 2
        %v476 = vadd.f32 %v474, %v475
        %v477 = vrot.slane %v476, 1
        %v478 = vadd.f32 %v476, %v477
        %v479 = vadd.f32 %v467, %v478
        %vm480 = vcmask 122880
        %481 = vst.msk [vmem:[#allocation3] sm:$0x1] %vm480, %v479
        %v482 = vld [vmem:[#allocation4] sm:$0x1]
        %v483 = vmul.f32 %v447, %v482
        %v484 = vsel %vm245, %v463, 0.0
        %v485 = vsel %vm245, %v464, 0.0
        %v486 = vadd.f32 %v484, %v485
        %v487 = vsel %vm245, %v465, 0.0
        %v488 = vadd.f32 %v486, %v487
        %v489 = vrot.slane %v488, 4
        %v490 = vadd.f32 %v488, %v489
        %v491 = vrot.slane %v490, 2
        %v492 = vadd.f32 %v490, %v491
        %v493 = vrot.slane %v492, 1
        %v494 = vadd.f32 %v492, %v493
        %v495 = vadd.f32 %v483, %v494
        %496 = vst.msk [vmem:[#allocation4] sm:$0x1] %vm480, %v495
        %v497 = vld [vmem:[#allocation5] sm:$0x1]
        %v498 = vmul.f32 %v447, %v497
        %v499 = vmul.f32 %v233, %v463
        %v500 = vmul.f32 %v234, %v464
        %v501 = vmul.f32 %v235, %v465
        %v502 = vsel %vm245, %v499, 0.0
        %v503 = vsel %vm245, %v500, 0.0
        %v504 = vadd.f32 %v502, %v503
        %v505 = vsel %vm245, %v501, 0.0
        %v506 = vadd.f32 %v504, %v505
        %v507 = vrot.slane %v506, 4
        %v508 = vadd.f32 %v506, %v507
        %v509 = vrot.slane %v508, 2
        %v510 = vadd.f32 %v508, %v509
        %v511 = vrot.slane %v510, 1
        %v512 = vadd.f32 %v510, %v511
        %v513 = vadd.f32 %v498, %v512
        %514 = vst.msk [vmem:[#allocation5] sm:$0x1] %vm480, %v513
        %515 = vst.msk [vmem:[#allocation2] sm:$0x1] %vm480, %v444
        // Predicated region
        $region41: #{tpu_custom_call.1} parent=35 // pred_check
          %p516 = pneg %p224
        $region42: #{tpu_custom_call.1} parent=35 // pred_check_branch
          %518 = sbr.rel (%p516) target = $region44
        $region43: #{tpu_custom_call.1} parent=35 // pred_region
          %v519 = vld [vmem:[#allocation3] sm:$0x1]
          %v520 = vrcp.pop %v519
          %v521 = vmul.f32 1.0, %v520
          %v522 = vld [vmem:[#allocation4] sm:$0x1]
          %v523 = vmul.f32 %v522, %v521
          %v524 = vld [vmem:[#allocation5] sm:$0x1]
          %v525 = vmul.f32 %v524, %v521
          %v526 = vmul.f32 %v523, %v523
          %v527 = vsub.f32 %v525, %v526
          %v528 = vmax.f32 %v527, 1e-05
          %v529 = vrsqrt.pop %v528
          %v530 = vmul.f32 %v528, %v529
          %vm531 = vcmp.eq.f32.partialorder %v528, inf
          %v532 = vsel %vm531, %v528, %v530
          %vm533 = vcmp.eq.f32.partialorder %v528, 0.0
          %v534 = vand.u32 %v528, 2147483648
          %v535 = vsel %vm533, %v534, %v532
          %v537 = vlaneseq
          %v538 = vshrl.u32 %v537, 7
          %v539 = vsub.s32 0, %v538
          %v540 = vrot.slane %v535, %v539
          %vm542 = vcmask 1040384
          %v543 = vsel %vm542, %v523, %v540
          %vm544 = vcmask 123904
          %545 = vst.msk [vmem:[%s213] sm:$0x3] %vm544, %v543
        $region44: #{tpu_custom_call.1} parent=35 // pred_fallthru
          _
        %s546 = sand.u32 %s129, 1
        %s547 = scalar_lea.sflag [#allocation7], %s546
        %s548 = sand.u32 %s129, 1
        %s549 = smul.addr %s548, 2
        %s550 = scalar_lea.vmem [#allocation6], %s549
        // Predicated region
        $region45: #{tpu_custom_call.1} parent=35 // pred_check
          %p551 = pneg %p139
        $region46: #{tpu_custom_call.1} parent=35 // pred_check_branch
          %553 = sbr.rel (%p551) target = $region48
        $region47: #{tpu_custom_call.1} parent=35 // pred_region
          %s555 = ssub.s32 32, 32
          %556 = vsyncadd %s547, %s555
          %s557 = smul.addr %s22, 32
          %s558 = scalar_lea.hbm %s4, %s557
          %s560 = sshll.u32 %s550, 4
          %s561 = int_to_ptr.vmem [resolvable:$true] %s560
          %563 = dma.vmem_to_hbm [thread:$0]  %s561, 32, %s558, %s547
        $region48: #{tpu_custom_call.1} parent=35 // pred_fallthru
          _
      $region36: #{tpu_custom_call.1} parent=5 // pred_fallthru
        _
      %p564 = scmp.le.s32.totalorder 2, %s13
      // Predicated region
      $region49: #{tpu_custom_call.1} parent=5 // pred_check
        %p565 = pneg %p564
      $region50: #{tpu_custom_call.1} parent=5 // pred_check_branch
        %567 = sbr.rel (%p565) target = $region52
      $region51: #{tpu_custom_call.1} parent=5 // pred_region
        %s568 = ssub.s32 %s13, 2
        // Predicated region
        $region53: #{tpu_custom_call.1} parent=51 // pred_check
          %p569 = pneg %p145
        $region54: #{tpu_custom_call.1} parent=51 // pred_check_branch
          %571 = sbr.rel (%p569) target = $region56
        $region55: #{tpu_custom_call.1} parent=51 // pred_region
          %s572 = sand.u32 %s130, 1
          %s573 = scalar_lea.sflag [#allocation7], %s572
          %s574 = sand.u32 %s130, 1
          %s575 = smul.addr %s574, 2
          %s576 = scalar_lea.vmem [#allocation6], %s575
          %577 = dma.done %s573, 32
        $region56: #{tpu_custom_call.1} parent=51 // pred_fallthru
          _
      $region52: #{tpu_custom_call.1} parent=5 // pred_fallthru
        _
    $region6: #{tpu_custom_call.1} parent=1 // loop_footer
      %s17 = sadd.s32 1, %s13
    $region7: #{tpu_custom_call.1} parent=1 // loop_footer_branch
      %12 = sbr.rel target = $region3
    $region8: #{tpu_custom_call.1} parent=1 // loop_exit
      _
    %578 = vsyncpa [#allocation7], 1
    %s579 = scalar_lea.sflag [#allocation7], 1
    %580 = vsyncpa %s579, 1

</llo_original>
